<compile_context>
chip_gen: v7x
topology: tpu7x:2x2x1
jax: 0.10.0
libtpu: 0.0.40
codegen_flags: <defaults>
</compile_context>

<pallas_src>
import math

import jax
import jax.numpy as jnp
import numpy as np
from jax import lax
from jax.experimental import pallas as pl
from jax.experimental.pallas import tpu as pltpu


# ------------------------------- wrapper + kernel -----------------------------
def bidirectional_lstm(x, params):
    T, B, nIn = x.shape
    H = params["whh_f"].shape[1]
    nOut = params["wemb"].shape[0]
    G2 = 2 * H                                   # fused gate-block width (fwd|bwd)
    OUT_PAD = max(128, ((nOut + 127) // 128) * 128)

    f32, bf16 = jnp.float32, jnp.bfloat16

    # PyTorch gate rows are [i, f, g, o]; fused column blocks are [i, f, o, g],
    # each 2H wide with forward in the left H columns and backward in the right H.
    gate_src = (0, 1, 3, 2)

    def place_w(w, d):
        # w: (4H, K) PyTorch layout -> (K, 8H) with this direction's columns
        # at [gate*2H + d*H : gate*2H + (d+1)*H], zeros elsewhere.
        K = w.shape[1]
        out = jnp.zeros((K, 8 * H), f32)
        for gi, src in enumerate(gate_src):
            out = out.at[:, gi * G2 + d * H: gi * G2 + (d + 1) * H].set(
                w[src * H:(src + 1) * H, :].T)
        return out

    def place_b(b, d):
        out = jnp.zeros((8 * H,), f32)
        for gi, src in enumerate(gate_src):
            out = out.at[gi * G2 + d * H: gi * G2 + (d + 1) * H].set(
                b[src * H:(src + 1) * H])
        return out

    # input-projection block weight: rows [0:nIn) hit x[t], rows [nIn:2nIn) hit x[T-1-t]
    w_in = jnp.concatenate(
        [place_w(params["wih_f"], 0), place_w(params["wih_b"], 1)], axis=0
    ).astype(bf16)                                                    # (2*nIn, 8H)
    b_in = (place_b(params["bih_f"] + params["bhh_f"], 0)
            + place_b(params["bih_b"] + params["bhh_b"], 1))[None, :].astype(f32)

    # recurrent weight: rows [0:H) = h_f contribution, rows [H:2H) = h_b contribution
    w_hh = jnp.concatenate(
        [place_w(params["whh_f"], 0), place_w(params["whh_b"], 1)], axis=0
    ).astype(bf16)                                                    # (2H, 8H)

    # embedding weight/bias, zero-padded to a lane-dense (128-wide) output
    w_emb = jnp.zeros((2 * H, OUT_PAD), f32).at[:, :nOut].set(
        params["wemb"].T).astype(bf16)                                # (2H, 128)
    b_emb = jnp.zeros((1, OUT_PAD), f32).at[:, :nOut].set(params["bemb"][None, :])

    # [x | x reversed in time] -> (T*B, 2*nIn), bf16 MXU operand
    x_f = x.reshape(T * B, nIn)
    x_r = x[::-1].reshape(T * B, nIn)
    x_cat = jnp.concatenate([x_f, x_r], axis=1).astype(bf16)

    def kernel(x_ref, win_ref, bin_ref, whh_ref, wemb_ref, bemb_ref, out_ref):
        # ---- hoisted input projection: one GEMM, both directions, all steps
        gx = jnp.dot(x_ref[...], win_ref[...],
                     preferred_element_type=jnp.float32) + bin_ref[...]  # (T*B, 8H) f32
        gx_t = [gx[t * B:(t + 1) * B, :] for t in range(T)]              # off the chain

        w_hh_v = whh_ref[...]                                            # loop-invariant

        h_cat = jnp.zeros((B, 2 * H), jnp.float32)   # [h_f(t) | h_b(T-1-t)]
        c_cat = jnp.zeros((B, 2 * H), jnp.float32)
        hs = []

        # fully-unrolled recurrence: one fused MXU push + 3 EUP launches per step,
        # no VMEM stores, no lane-axis concat inside the chain
        for t in range(T):
            rec = jnp.dot(h_cat.astype(jnp.bfloat16), w_hh_v,
                          preferred_element_type=jnp.float32)            # (B, 8H)
            gates = rec + gx_t[t]
            s = jax.nn.sigmoid(gates[:, :6 * H])     # i|f|o, both directions, one launch
            i_c = s[:, :2 * H]
            f_c = s[:, 2 * H:4 * H]
            o_c = s[:, 4 * H:6 * H]
            g_c = jnp.tanh(gates[:, 6 * H:])
            c_cat = f_c * c_cat + i_c * g_c
            h_cat = o_c * jnp.tanh(c_cat)
            hs.append(h_cat)

        # ---- assemble (T*B, 2H) hidden states in time order: [h_f(t) | h_b(t)]
        hf = jnp.concatenate([hs[t][:, :H] for t in range(T)], axis=0)       # (T*B, H)
        hb = jnp.concatenate([hs[T - 1 - t][:, H:] for t in range(T)], axis=0)
        hidden = jnp.concatenate([hf, hb], axis=1).astype(jnp.bfloat16)      # (T*B, 2H)

        # ---- single epilogue GEMM, lane-dense (padded to 128) output store
        out = jnp.dot(hidden, wemb_ref[...],
                      preferred_element_type=jnp.float32) + bemb_ref[...]
        out_ref[...] = out

    vmem = pl.BlockSpec(memory_space=pltpu.MemorySpace.VMEM)

    out_flat = pl.pallas_call(
        kernel,
        out_shape=jax.ShapeDtypeStruct((T * B, OUT_PAD), jnp.float32),
        in_specs=[vmem] * 6,
        out_specs=vmem,
    )(x_cat, w_in, b_in, w_hh, w_emb, b_emb)

    return out_flat[:, :nOut].reshape(T, B, nOut)


# ---------------------------- pure-JAX reference ------------------------------
def reference(x, p):
    H = p["whh_f"].shape[1]

    def run_dir(xs, wih, whh, bias):
        def step(carry, x_t):
            h, c = carry
            gates = x_t @ wih.T + h @ whh.T + bias
            i_g = jax.nn.sigmoid(gates[:, 0:H])
            f_g = jax.nn.sigmoid(gates[:, H:2 * H])
            g_g = jnp.tanh(gates[:, 2 * H:3 * H])
            o_g = jax.nn.sigmoid(gates[:, 3 * H:4 * H])
            c = f_g * c + i_g * g_g
            h = o_g * jnp.tanh(c)
            return (h, c), h

        B = xs.shape[1]
        init = (jnp.zeros((B, H), jnp.float32), jnp.zeros((B, H), jnp.float32))
        _, hs = lax.scan(step, init, xs)
        return hs

    hf = run_dir(x, p["wih_f"], p["whh_f"], p["bih_f"] + p["bhh_f"])
    hb = run_dir(x[::-1], p["wih_b"], p["whh_b"], p["bih_b"] + p["bhh_b"])[::-1]
    rec = jnp.concatenate([hf, hb], axis=-1)
    T, B, h2 = rec.shape
    out = rec.reshape(T * B, h2) @ p["wemb"].T + p["bemb"]
    return out.reshape(T, B, -1)


# -------------------------------- main ----------------------------------------
if __name__ == "__main__":
    T, B, nIn, H, nOut = 8, 2, 16, 32, 16

    key = jax.random.PRNGKey(0)
    ks = jax.random.split(key, 12)
    s_lstm = 1.0 / math.sqrt(H)
    s_emb = 1.0 / math.sqrt(2 * H)

    def u(k, shape, s):
        return jax.random.uniform(k, shape, jnp.float32, minval=-s, maxval=s)

    params = {
        # forward direction (PyTorch weight_ih_l0 / weight_hh_l0 / biases)
        "wih_f": u(ks[0], (4 * H, nIn), s_lstm),
        "whh_f": u(ks[1], (4 * H, H), s_lstm),
        "bih_f": u(ks[2], (4 * H,), s_lstm),
        "bhh_f": u(ks[3], (4 * H,), s_lstm),
        # reverse direction (..._l0_reverse)
        "wih_b": u(ks[4], (4 * H, nIn), s_lstm),
        "whh_b": u(ks[5], (4 * H, H), s_lstm),
        "bih_b": u(ks[6], (4 * H,), s_lstm),
        "bhh_b": u(ks[7], (4 * H,), s_lstm),
        # embedding Linear(2H, nOut)
        "wemb": u(ks[8], (nOut, 2 * H), s_emb),
        "bemb": u(ks[9], (nOut,), s_emb),
    }

    x = jax.random.normal(ks[10], (T, B, nIn), jnp.float32)

    out = bidirectional_lstm(x, params)
    out = jax.block_until_ready(out)

    ref = jax.block_until_ready(reference(x, params))
    assert out.shape == (T, B, nOut), out.shape
    # bf16 MXU operands with f32 accumulation -> tolerance relaxed vs pure f32.
    np.testing.assert_allclose(np.asarray(out), np.asarray(ref), atol=1e-2, rtol=1e-2)

    print("KERNEL_OK")
</pallas_src>

<mosaic_0001>
module attributes {stable_mosaic.version = 11 : i64} {
  func.func @kernel(%arg0: memref<16x32xbf16, #tpu.memory_space<vmem>>, %arg1: memref<32x256xbf16, #tpu.memory_space<vmem>>, %arg2: memref<1x256xf32, #tpu.memory_space<vmem>>, %arg3: memref<64x256xbf16, #tpu.memory_space<vmem>>, %arg4: memref<64x128xbf16, #tpu.memory_space<vmem>>, %arg5: memref<1x128xf32, #tpu.memory_space<vmem>>, %arg6: memref<16x128xf32, #tpu.memory_space<vmem>>) attributes {dimension_semantics = [], scalar_prefetch = 0 : i64, scratch_operands = 0 : i64, tpu.core_type = #tpu.core_type<tc>} {
    %c0 = arith.constant 0 : index
    %c0_0 = arith.constant 0 : index
    %0 = vector.load %arg0[%c0, %c0_0] : memref<16x32xbf16, #tpu.memory_space<vmem>>, vector<16x32xbf16>
    %c0_1 = arith.constant 0 : index
    %c0_2 = arith.constant 0 : index
    %1 = vector.load %arg1[%c0_1, %c0_2] : memref<32x256xbf16, #tpu.memory_space<vmem>>, vector<32x256xbf16>
    %cst = arith.constant dense<0.000000e+00> : vector<16x256xf32>
    %2 = tpu.matmul %0, %1, %cst {dimension_numbers = #tpu.dot_dimension_numbers<[1], [0], [0], [1], [0, 0, 1, 1], [], []>} : vector<16x32xbf16>, vector<32x256xbf16>, vector<16x256xf32> -> vector<16x256xf32>
    %c0_3 = arith.constant 0 : index
    %c0_4 = arith.constant 0 : index
    %3 = vector.load %arg2[%c0_3, %c0_4] : memref<1x256xf32, #tpu.memory_space<vmem>>, vector<1x256xf32>
    %4 = vector.broadcast %3 : vector<1x256xf32> to vector<16x256xf32>
    %5 = arith.addf %2, %4 : vector<16x256xf32>
    %6 = vector.extract_strided_slice %5 {offsets = [0, 0], sizes = [2, 256], strides = [1, 1]} : vector<16x256xf32> to vector<2x256xf32>
    %7 = vector.extract_strided_slice %5 {offsets = [2, 0], sizes = [2, 256], strides = [1, 1]} : vector<16x256xf32> to vector<2x256xf32>
    %8 = vector.extract_strided_slice %5 {offsets = [4, 0], sizes = [2, 256], strides = [1, 1]} : vector<16x256xf32> to vector<2x256xf32>
    %9 = vector.extract_strided_slice %5 {offsets = [6, 0], sizes = [2, 256], strides = [1, 1]} : vector<16x256xf32> to vector<2x256xf32>
    %10 = vector.extract_strided_slice %5 {offsets = [8, 0], sizes = [2, 256], strides = [1, 1]} : vector<16x256xf32> to vector<2x256xf32>
    %11 = vector.extract_strided_slice %5 {offsets = [10, 0], sizes = [2, 256], strides = [1, 1]} : vector<16x256xf32> to vector<2x256xf32>
    %12 = vector.extract_strided_slice %5 {offsets = [12, 0], sizes = [2, 256], strides = [1, 1]} : vector<16x256xf32> to vector<2x256xf32>
    %13 = vector.extract_strided_slice %5 {offsets = [14, 0], sizes = [2, 256], strides = [1, 1]} : vector<16x256xf32> to vector<2x256xf32>
    %c0_5 = arith.constant 0 : index
    %c0_6 = arith.constant 0 : index
    %14 = vector.load %arg3[%c0_5, %c0_6] : memref<64x256xbf16, #tpu.memory_space<vmem>>, vector<64x256xbf16>
    %cst_7 = arith.constant 0.000000e+00 : f32
    %15 = vector.broadcast %cst_7 : f32 to vector<2x64xf32>
    %cst_8 = arith.constant 0.000000e+00 : f32
    %16 = vector.broadcast %cst_8 : f32 to vector<2x64xf32>
    %17 = arith.truncf %15 : vector<2x64xf32> to vector<2x64xbf16>
    %cst_9 = arith.constant dense<0.000000e+00> : vector<2x256xf32>
    %18 = tpu.matmul %17, %14, %cst_9 {dimension_numbers = #tpu.dot_dimension_numbers<[1], [0], [0], [1], [0, 0, 1, 1], [], []>} : vector<2x64xbf16>, vector<64x256xbf16>, vector<2x256xf32> -> vector<2x256xf32>
    %19 = arith.addf %18, %6 : vector<2x256xf32>
    %20 = vector.extract_strided_slice %19 {offsets = [0, 0], sizes = [2, 192], strides = [1, 1]} : vector<2x256xf32> to vector<2x192xf32>
    %21 = arith.negf %20 : vector<2x192xf32>
    %22 = math.exp %21 : vector<2x192xf32>
    %cst_10 = arith.constant 1.000000e+00 : f32
    %23 = vector.broadcast %cst_10 : f32 to vector<2x192xf32>
    %24 = arith.addf %23, %22 : vector<2x192xf32>
    %25 = arith.divf %23, %24 : vector<2x192xf32>
    %26 = vector.extract_strided_slice %25 {offsets = [0, 0], sizes = [2, 64], strides = [1, 1]} : vector<2x192xf32> to vector<2x64xf32>
    %27 = vector.extract_strided_slice %25 {offsets = [0, 64], sizes = [2, 64], strides = [1, 1]} : vector<2x192xf32> to vector<2x64xf32>
    %28 = vector.extract_strided_slice %25 {offsets = [0, 128], sizes = [2, 64], strides = [1, 1]} : vector<2x192xf32> to vector<2x64xf32>
    %29 = vector.extract_strided_slice %19 {offsets = [0, 192], sizes = [2, 64], strides = [1, 1]} : vector<2x256xf32> to vector<2x64xf32>
    %30 = math.tanh %29 : vector<2x64xf32>
    %31 = arith.mulf %27, %16 : vector<2x64xf32>
    %32 = arith.mulf %26, %30 : vector<2x64xf32>
    %33 = arith.addf %31, %32 : vector<2x64xf32>
    %34 = math.tanh %33 : vector<2x64xf32>
    %35 = arith.mulf %28, %34 : vector<2x64xf32>
    %36 = arith.truncf %35 : vector<2x64xf32> to vector<2x64xbf16>
    %cst_11 = arith.constant dense<0.000000e+00> : vector<2x256xf32>
    %37 = tpu.matmul %36, %14, %cst_11 {dimension_numbers = #tpu.dot_dimension_numbers<[1], [0], [0], [1], [0, 0, 1, 1], [], []>} : vector<2x64xbf16>, vector<64x256xbf16>, vector<2x256xf32> -> vector<2x256xf32>
    %38 = arith.addf %37, %7 : vector<2x256xf32>
    %39 = vector.extract_strided_slice %38 {offsets = [0, 0], sizes = [2, 192], strides = [1, 1]} : vector<2x256xf32> to vector<2x192xf32>
    %40 = arith.negf %39 : vector<2x192xf32>
    %41 = math.exp %40 : vector<2x192xf32>
    %cst_12 = arith.constant 1.000000e+00 : f32
    %42 = vector.broadcast %cst_12 : f32 to vector<2x192xf32>
    %43 = arith.addf %42, %41 : vector<2x192xf32>
    %44 = arith.divf %42, %43 : vector<2x192xf32>
    %45 = vector.extract_strided_slice %44 {offsets = [0, 0], sizes = [2, 64], strides = [1, 1]} : vector<2x192xf32> to vector<2x64xf32>
    %46 = vector.extract_strided_slice %44 {offsets = [0, 64], sizes = [2, 64], strides = [1, 1]} : vector<2x192xf32> to vector<2x64xf32>
    %47 = vector.extract_strided_slice %44 {offsets = [0, 128], sizes = [2, 64], strides = [1, 1]} : vector<2x192xf32> to vector<2x64xf32>
    %48 = vector.extract_strided_slice %38 {offsets = [0, 192], sizes = [2, 64], strides = [1, 1]} : vector<2x256xf32> to vector<2x64xf32>
    %49 = math.tanh %48 : vector<2x64xf32>
    %50 = arith.mulf %46, %33 : vector<2x64xf32>
    %51 = arith.mulf %45, %49 : vector<2x64xf32>
    %52 = arith.addf %50, %51 : vector<2x64xf32>
    %53 = math.tanh %52 : vector<2x64xf32>
    %54 = arith.mulf %47, %53 : vector<2x64xf32>
    %55 = arith.truncf %54 : vector<2x64xf32> to vector<2x64xbf16>
    %cst_13 = arith.constant dense<0.000000e+00> : vector<2x256xf32>
    %56 = tpu.matmul %55, %14, %cst_13 {dimension_numbers = #tpu.dot_dimension_numbers<[1], [0], [0], [1], [0, 0, 1, 1], [], []>} : vector<2x64xbf16>, vector<64x256xbf16>, vector<2x256xf32> -> vector<2x256xf32>
    %57 = arith.addf %56, %8 : vector<2x256xf32>
    %58 = vector.extract_strided_slice %57 {offsets = [0, 0], sizes = [2, 192], strides = [1, 1]} : vector<2x256xf32> to vector<2x192xf32>
    %59 = arith.negf %58 : vector<2x192xf32>
    %60 = math.exp %59 : vector<2x192xf32>
    %cst_14 = arith.constant 1.000000e+00 : f32
    %61 = vector.broadcast %cst_14 : f32 to vector<2x192xf32>
    %62 = arith.addf %61, %60 : vector<2x192xf32>
    %63 = arith.divf %61, %62 : vector<2x192xf32>
    %64 = vector.extract_strided_slice %63 {offsets = [0, 0], sizes = [2, 64], strides = [1, 1]} : vector<2x192xf32> to vector<2x64xf32>
    %65 = vector.extract_strided_slice %63 {offsets = [0, 64], sizes = [2, 64], strides = [1, 1]} : vector<2x192xf32> to vector<2x64xf32>
    %66 = vector.extract_strided_slice %63 {offsets = [0, 128], sizes = [2, 64], strides = [1, 1]} : vector<2x192xf32> to vector<2x64xf32>
    %67 = vector.extract_strided_slice %57 {offsets = [0, 192], sizes = [2, 64], strides = [1, 1]} : vector<2x256xf32> to vector<2x64xf32>
    %68 = math.tanh %67 : vector<2x64xf32>
    %69 = arith.mulf %65, %52 : vector<2x64xf32>
    %70 = arith.mulf %64, %68 : vector<2x64xf32>
    %71 = arith.addf %69, %70 : vector<2x64xf32>
    %72 = math.tanh %71 : vector<2x64xf32>
    %73 = arith.mulf %66, %72 : vector<2x64xf32>
    %74 = arith.truncf %73 : vector<2x64xf32> to vector<2x64xbf16>
    %cst_15 = arith.constant dense<0.000000e+00> : vector<2x256xf32>
    %75 = tpu.matmul %74, %14, %cst_15 {dimension_numbers = #tpu.dot_dimension_numbers<[1], [0], [0], [1], [0, 0, 1, 1], [], []>} : vector<2x64xbf16>, vector<64x256xbf16>, vector<2x256xf32> -> vector<2x256xf32>
    %76 = arith.addf %75, %9 : vector<2x256xf32>
    %77 = vector.extract_strided_slice %76 {offsets = [0, 0], sizes = [2, 192], strides = [1, 1]} : vector<2x256xf32> to vector<2x192xf32>
    %78 = arith.negf %77 : vector<2x192xf32>
    %79 = math.exp %78 : vector<2x192xf32>
    %cst_16 = arith.constant 1.000000e+00 : f32
    %80 = vector.broadcast %cst_16 : f32 to vector<2x192xf32>
    %81 = arith.addf %80, %79 : vector<2x192xf32>
    %82 = arith.divf %80, %81 : vector<2x192xf32>
    %83 = vector.extract_strided_slice %82 {offsets = [0, 0], sizes = [2, 64], strides = [1, 1]} : vector<2x192xf32> to vector<2x64xf32>
    %84 = vector.extract_strided_slice %82 {offsets = [0, 64], sizes = [2, 64], strides = [1, 1]} : vector<2x192xf32> to vector<2x64xf32>
    %85 = vector.extract_strided_slice %82 {offsets = [0, 128], sizes = [2, 64], strides = [1, 1]} : vector<2x192xf32> to vector<2x64xf32>
    %86 = vector.extract_strided_slice %76 {offsets = [0, 192], sizes = [2, 64], strides = [1, 1]} : vector<2x256xf32> to vector<2x64xf32>
    %87 = math.tanh %86 : vector<2x64xf32>
    %88 = arith.mulf %84, %71 : vector<2x64xf32>
    %89 = arith.mulf %83, %87 : vector<2x64xf32>
    %90 = arith.addf %88, %89 : vector<2x64xf32>
    %91 = math.tanh %90 : vector<2x64xf32>
    %92 = arith.mulf %85, %91 : vector<2x64xf32>
    %93 = arith.truncf %92 : vector<2x64xf32> to vector<2x64xbf16>
    %cst_17 = arith.constant dense<0.000000e+00> : vector<2x256xf32>
    %94 = tpu.matmul %93, %14, %cst_17 {dimension_numbers = #tpu.dot_dimension_numbers<[1], [0], [0], [1], [0, 0, 1, 1], [], []>} : vector<2x64xbf16>, vector<64x256xbf16>, vector<2x256xf32> -> vector<2x256xf32>
    %95 = arith.addf %94, %10 : vector<2x256xf32>
    %96 = vector.extract_strided_slice %95 {offsets = [0, 0], sizes = [2, 192], strides = [1, 1]} : vector<2x256xf32> to vector<2x192xf32>
    %97 = arith.negf %96 : vector<2x192xf32>
    %98 = math.exp %97 : vector<2x192xf32>
    %cst_18 = arith.constant 1.000000e+00 : f32
    %99 = vector.broadcast %cst_18 : f32 to vector<2x192xf32>
    %100 = arith.addf %99, %98 : vector<2x192xf32>
    %101 = arith.divf %99, %100 : vector<2x192xf32>
    %102 = vector.extract_strided_slice %101 {offsets = [0, 0], sizes = [2, 64], strides = [1, 1]} : vector<2x192xf32> to vector<2x64xf32>
    %103 = vector.extract_strided_slice %101 {offsets = [0, 64], sizes = [2, 64], strides = [1, 1]} : vector<2x192xf32> to vector<2x64xf32>
    %104 = vector.extract_strided_slice %101 {offsets = [0, 128], sizes = [2, 64], strides = [1, 1]} : vector<2x192xf32> to vector<2x64xf32>
    %105 = vector.extract_strided_slice %95 {offsets = [0, 192], sizes = [2, 64], strides = [1, 1]} : vector<2x256xf32> to vector<2x64xf32>
    %106 = math.tanh %105 : vector<2x64xf32>
    %107 = arith.mulf %103, %90 : vector<2x64xf32>
    %108 = arith.mulf %102, %106 : vector<2x64xf32>
    %109 = arith.addf %107, %108 : vector<2x64xf32>
    %110 = math.tanh %109 : vector<2x64xf32>
    %111 = arith.mulf %104, %110 : vector<2x64xf32>
    %112 = arith.truncf %111 : vector<2x64xf32> to vector<2x64xbf16>
    %cst_19 = arith.constant dense<0.000000e+00> : vector<2x256xf32>
    %113 = tpu.matmul %112, %14, %cst_19 {dimension_numbers = #tpu.dot_dimension_numbers<[1], [0], [0], [1], [0, 0, 1, 1], [], []>} : vector<2x64xbf16>, vector<64x256xbf16>, vector<2x256xf32> -> vector<2x256xf32>
    %114 = arith.addf %113, %11 : vector<2x256xf32>
    %115 = vector.extract_strided_slice %114 {offsets = [0, 0], sizes = [2, 192], strides = [1, 1]} : vector<2x256xf32> to vector<2x192xf32>
    %116 = arith.negf %115 : vector<2x192xf32>
    %117 = math.exp %116 : vector<2x192xf32>
    %cst_20 = arith.constant 1.000000e+00 : f32
    %118 = vector.broadcast %cst_20 : f32 to vector<2x192xf32>
    %119 = arith.addf %118, %117 : vector<2x192xf32>
    %120 = arith.divf %118, %119 : vector<2x192xf32>
    %121 = vector.extract_strided_slice %120 {offsets = [0, 0], sizes = [2, 64], strides = [1, 1]} : vector<2x192xf32> to vector<2x64xf32>
    %122 = vector.extract_strided_slice %120 {offsets = [0, 64], sizes = [2, 64], strides = [1, 1]} : vector<2x192xf32> to vector<2x64xf32>
    %123 = vector.extract_strided_slice %120 {offsets = [0, 128], sizes = [2, 64], strides = [1, 1]} : vector<2x192xf32> to vector<2x64xf32>
    %124 = vector.extract_strided_slice %114 {offsets = [0, 192], sizes = [2, 64], strides = [1, 1]} : vector<2x256xf32> to vector<2x64xf32>
    %125 = math.tanh %124 : vector<2x64xf32>
    %126 = arith.mulf %122, %109 : vector<2x64xf32>
    %127 = arith.mulf %121, %125 : vector<2x64xf32>
    %128 = arith.addf %126, %127 : vector<2x64xf32>
    %129 = math.tanh %128 : vector<2x64xf32>
    %130 = arith.mulf %123, %129 : vector<2x64xf32>
    %131 = arith.truncf %130 : vector<2x64xf32> to vector<2x64xbf16>
    %cst_21 = arith.constant dense<0.000000e+00> : vector<2x256xf32>
    %132 = tpu.matmul %131, %14, %cst_21 {dimension_numbers = #tpu.dot_dimension_numbers<[1], [0], [0], [1], [0, 0, 1, 1], [], []>} : vector<2x64xbf16>, vector<64x256xbf16>, vector<2x256xf32> -> vector<2x256xf32>
    %133 = arith.addf %132, %12 : vector<2x256xf32>
    %134 = vector.extract_strided_slice %133 {offsets = [0, 0], sizes = [2, 192], strides = [1, 1]} : vector<2x256xf32> to vector<2x192xf32>
    %135 = arith.negf %134 : vector<2x192xf32>
    %136 = math.exp %135 : vector<2x192xf32>
    %cst_22 = arith.constant 1.000000e+00 : f32
    %137 = vector.broadcast %cst_22 : f32 to vector<2x192xf32>
    %138 = arith.addf %137, %136 : vector<2x192xf32>
    %139 = arith.divf %137, %138 : vector<2x192xf32>
    %140 = vector.extract_strided_slice %139 {offsets = [0, 0], sizes = [2, 64], strides = [1, 1]} : vector<2x192xf32> to vector<2x64xf32>
    %141 = vector.extract_strided_slice %139 {offsets = [0, 64], sizes = [2, 64], strides = [1, 1]} : vector<2x192xf32> to vector<2x64xf32>
    %142 = vector.extract_strided_slice %139 {offsets = [0, 128], sizes = [2, 64], strides = [1, 1]} : vector<2x192xf32> to vector<2x64xf32>
    %143 = vector.extract_strided_slice %133 {offsets = [0, 192], sizes = [2, 64], strides = [1, 1]} : vector<2x256xf32> to vector<2x64xf32>
    %144 = math.tanh %143 : vector<2x64xf32>
    %145 = arith.mulf %141, %128 : vector<2x64xf32>
    %146 = arith.mulf %140, %144 : vector<2x64xf32>
    %147 = arith.addf %145, %146 : vector<2x64xf32>
    %148 = math.tanh %147 : vector<2x64xf32>
    %149 = arith.mulf %142, %148 : vector<2x64xf32>
    %150 = arith.truncf %149 : vector<2x64xf32> to vector<2x64xbf16>
    %cst_23 = arith.constant dense<0.000000e+00> : vector<2x256xf32>
    %151 = tpu.matmul %150, %14, %cst_23 {dimension_numbers = #tpu.dot_dimension_numbers<[1], [0], [0], [1], [0, 0, 1, 1], [], []>} : vector<2x64xbf16>, vector<64x256xbf16>, vector<2x256xf32> -> vector<2x256xf32>
    %152 = arith.addf %151, %13 : vector<2x256xf32>
    %153 = vector.extract_strided_slice %152 {offsets = [0, 0], sizes = [2, 192], strides = [1, 1]} : vector<2x256xf32> to vector<2x192xf32>
    %154 = arith.negf %153 : vector<2x192xf32>
    %155 = math.exp %154 : vector<2x192xf32>
    %cst_24 = arith.constant 1.000000e+00 : f32
    %156 = vector.broadcast %cst_24 : f32 to vector<2x192xf32>
    %157 = arith.addf %156, %155 : vector<2x192xf32>
    %158 = arith.divf %156, %157 : vector<2x192xf32>
    %159 = vector.extract_strided_slice %158 {offsets = [0, 0], sizes = [2, 64], strides = [1, 1]} : vector<2x192xf32> to vector<2x64xf32>
    %160 = vector.extract_strided_slice %158 {offsets = [0, 64], sizes = [2, 64], strides = [1, 1]} : vector<2x192xf32> to vector<2x64xf32>
    %161 = vector.extract_strided_slice %158 {offsets = [0, 128], sizes = [2, 64], strides = [1, 1]} : vector<2x192xf32> to vector<2x64xf32>
    %162 = vector.extract_strided_slice %152 {offsets = [0, 192], sizes = [2, 64], strides = [1, 1]} : vector<2x256xf32> to vector<2x64xf32>
    %163 = math.tanh %162 : vector<2x64xf32>
    %164 = arith.mulf %160, %147 : vector<2x64xf32>
    %165 = arith.mulf %159, %163 : vector<2x64xf32>
    %166 = arith.addf %164, %165 : vector<2x64xf32>
    %167 = math.tanh %166 : vector<2x64xf32>
    %168 = arith.mulf %161, %167 : vector<2x64xf32>
    %169 = vector.extract_strided_slice %35 {offsets = [0, 0], sizes = [2, 32], strides = [1, 1]} : vector<2x64xf32> to vector<2x32xf32>
    %170 = vector.extract_strided_slice %54 {offsets = [0, 0], sizes = [2, 32], strides = [1, 1]} : vector<2x64xf32> to vector<2x32xf32>
    %171 = vector.extract_strided_slice %73 {offsets = [0, 0], sizes = [2, 32], strides = [1, 1]} : vector<2x64xf32> to vector<2x32xf32>
    %172 = vector.extract_strided_slice %92 {offsets = [0, 0], sizes = [2, 32], strides = [1, 1]} : vector<2x64xf32> to vector<2x32xf32>
    %173 = vector.extract_strided_slice %111 {offsets = [0, 0], sizes = [2, 32], strides = [1, 1]} : vector<2x64xf32> to vector<2x32xf32>
    %174 = vector.extract_strided_slice %130 {offsets = [0, 0], sizes = [2, 32], strides = [1, 1]} : vector<2x64xf32> to vector<2x32xf32>
    %175 = vector.extract_strided_slice %149 {offsets = [0, 0], sizes = [2, 32], strides = [1, 1]} : vector<2x64xf32> to vector<2x32xf32>
    %176 = vector.extract_strided_slice %168 {offsets = [0, 0], sizes = [2, 32], strides = [1, 1]} : vector<2x64xf32> to vector<2x32xf32>
    %177 = tpu.concatenate %169, %170, %171, %172, %173, %174, %175, %176 in 0 : vector<2x32xf32>, vector<2x32xf32>, vector<2x32xf32>, vector<2x32xf32>, vector<2x32xf32>, vector<2x32xf32>, vector<2x32xf32>, vector<2x32xf32> -> vector<16x32xf32>
    %178 = vector.extract_strided_slice %168 {offsets = [0, 32], sizes = [2, 32], strides = [1, 1]} : vector<2x64xf32> to vector<2x32xf32>
    %179 = vector.extract_strided_slice %149 {offsets = [0, 32], sizes = [2, 32], strides = [1, 1]} : vector<2x64xf32> to vector<2x32xf32>
    %180 = vector.extract_strided_slice %130 {offsets = [0, 32], sizes = [2, 32], strides = [1, 1]} : vector<2x64xf32> to vector<2x32xf32>
    %181 = vector.extract_strided_slice %111 {offsets = [0, 32], sizes = [2, 32], strides = [1, 1]} : vector<2x64xf32> to vector<2x32xf32>
    %182 = vector.extract_strided_slice %92 {offsets = [0, 32], sizes = [2, 32], strides = [1, 1]} : vector<2x64xf32> to vector<2x32xf32>
    %183 = vector.extract_strided_slice %73 {offsets = [0, 32], sizes = [2, 32], strides = [1, 1]} : vector<2x64xf32> to vector<2x32xf32>
    %184 = vector.extract_strided_slice %54 {offsets = [0, 32], sizes = [2, 32], strides = [1, 1]} : vector<2x64xf32> to vector<2x32xf32>
    %185 = vector.extract_strided_slice %35 {offsets = [0, 32], sizes = [2, 32], strides = [1, 1]} : vector<2x64xf32> to vector<2x32xf32>
    %186 = tpu.concatenate %178, %179, %180, %181, %182, %183, %184, %185 in 0 : vector<2x32xf32>, vector<2x32xf32>, vector<2x32xf32>, vector<2x32xf32>, vector<2x32xf32>, vector<2x32xf32>, vector<2x32xf32>, vector<2x32xf32> -> vector<16x32xf32>
    %187 = tpu.concatenate %177, %186 in 1 : vector<16x32xf32>, vector<16x32xf32> -> vector<16x64xf32>
    %188 = arith.truncf %187 : vector<16x64xf32> to vector<16x64xbf16>
    %c0_25 = arith.constant 0 : index
    %c0_26 = arith.constant 0 : index
    %189 = vector.load %arg4[%c0_25, %c0_26] : memref<64x128xbf16, #tpu.memory_space<vmem>>, vector<64x128xbf16>
    %cst_27 = arith.constant dense<0.000000e+00> : vector<16x128xf32>
    %190 = tpu.matmul %188, %189, %cst_27 {dimension_numbers = #tpu.dot_dimension_numbers<[1], [0], [0], [1], [0, 0, 1, 1], [], []>} : vector<16x64xbf16>, vector<64x128xbf16>, vector<16x128xf32> -> vector<16x128xf32>
    %c0_28 = arith.constant 0 : index
    %c0_29 = arith.constant 0 : index
    %191 = vector.load %arg5[%c0_28, %c0_29] : memref<1x128xf32, #tpu.memory_space<vmem>>, vector<1x128xf32>
    %192 = vector.broadcast %191 : vector<1x128xf32> to vector<16x128xf32>
    %193 = arith.addf %190, %192 : vector<16x128xf32>
    %c0_30 = arith.constant 0 : index
    %c0_31 = arith.constant 0 : index
    %194 = vector.load %arg6[%c0_30, %c0_31] : memref<16x128xf32, #tpu.memory_space<vmem>>, vector<16x128xf32>
    tpu.vector_store %arg6[%c0_30, %c0_31], %193 {strides = array<i32>} : memref<16x128xf32, #tpu.memory_space<vmem>>, vector<16x128xf32>,
    return
  }
}

</mosaic_0001>

<llo_original>
// kernel: tpu_custom_call.1
$region0: #{tpu_custom_call.1}
  #allocation0 [shape = 'u32[]', space=smem, size = 0x4, offset = 0x4, fixed_abs, tag = 'smem constant byte address 0x4 - core index']
  #allocation1 [shape = 'u32[144,128]{1,0:T(1,128)}', space=vmem, size = 0x12000, scoped, tag = 'internal scratch']
  %s0 = inlined_call_operand.hbm [shape: bf16[16,32], index: 0, kind: input, shape index: {}]
  %s1 = inlined_call_operand.hbm [shape: bf16[32,256], index: 1, kind: input, shape index: {}]
  %s2 = inlined_call_operand.vmem [shape: f32[1,256], index: 2, kind: input, shape index: {}]
  %s3 = inlined_call_operand.hbm [shape: bf16[64,256], index: 3, kind: input, shape index: {}]
  %s4 = inlined_call_operand.hbm [shape: bf16[64,128], index: 4, kind: input, shape index: {}]
  %s5 = inlined_call_operand.vmem [shape: f32[1,128], index: 5, kind: input, shape index: {}]
  %s6 = inlined_call_operand.hbm [shape: f32[16,128], index: 6, kind: output, shape index: {}]
  %s7 = sld [smem:[#allocation0]]
  $region50: #{tpu_custom_call.1} parent=0
    _
  %s9 = ssub.s32 1, %s7
  %s10 = scalar_select 0, %s9, %s7
  $region1: #{tpu_custom_call.1} parent=0
    #allocation2 [shape = 'u8[4096]{0}', space=vmem, size = 0x1000, scoped, tag = 'input window, operand 0, single buffered']
    #allocation3 [shape = 's32[1]{0}', space=sflag, size = 0x4, scoped, tag = 'scoped memory for tpu_custom_call.1']
    #allocation4 [shape = 's32[1]{0}', space=sflag, size = 0x4, scoped, tag = 'scoped memory for tpu_custom_call.1']
    #allocation5 [shape = 'u8[16384]{0}', space=vmem, size = 0x4000, scoped, tag = 'input window, operand 1, single buffered']
    #allocation6 [shape = 's32[1]{0}', space=sflag, size = 0x4, scoped, tag = 'scoped memory for tpu_custom_call.1']
    #allocation7 [shape = 'u8[32768]{0}', space=vmem, size = 0x8000, scoped, tag = 'input window, operand 3, single buffered']
    #allocation8 [shape = 'u8[16384]{0}', space=vmem, size = 0x4000, scoped, tag = 'input window, operand 4, single buffered']
    #allocation9 [shape = 's32[1]{0}', space=sflag, size = 0x4, scoped, tag = 'scoped memory for tpu_custom_call.1']
    #allocation10 [shape = 'u8[8192]{0}', space=vmem, size = 0x2000, scoped, tag = 'output window, operand 0, single buffered']
    %11 = vsyncpa [#allocation3], 0
    %12 = vsyncpa [#allocation6], 0
    %13 = vsyncpa [#allocation9], 0
    %14 = vsyncpa [#allocation4], 0
    // Predicated region
    $region2: #{tpu_custom_call.1} parent=1 // pred_check
      _
    $region3: #{tpu_custom_call.1} parent=1 // pred_check_branch
      %16 = sbr.rel (0) target = $region5
    $region4: #{tpu_custom_call.1} parent=1 // pred_region
      %s18 = ssub.s32 128, 128
      %19 = vsyncadd [#allocation3], %s18
      %s20 = sshll.u32 [#allocation2], 4
      %s21 = int_to_ptr.vmem [resolvable:$true] %s20
      %26 = dma.hbm_to_vmem [thread:$0]  %s0, 128, %s21, [#allocation3], 64, 64, 4
    $region5: #{tpu_custom_call.1} parent=1 // pred_fallthru
      _
    // Predicated region
    $region6: #{tpu_custom_call.1} parent=1 // pred_check
      _
    $region7: #{tpu_custom_call.1} parent=1 // pred_check_branch
      %28 = sbr.rel (0) target = $region9
    $region8: #{tpu_custom_call.1} parent=1 // pred_region
      %s30 = ssub.s32 512, 512
      %31 = vsyncadd [#allocation6], %s30
      %s32 = sshll.u32 [#allocation5], 4
      %s33 = int_to_ptr.vmem [resolvable:$true] %s32
      %38 = dma.hbm_to_vmem [thread:$0]  %s1, 512, %s33, [#allocation6], 128, 128, 8
    $region9: #{tpu_custom_call.1} parent=1 // pred_fallthru
      _
    // Predicated region
    $region10: #{tpu_custom_call.1} parent=1 // pred_check
      _
    $region11: #{tpu_custom_call.1} parent=1 // pred_check_branch
      %40 = sbr.rel (0) target = $region13
    $region12: #{tpu_custom_call.1} parent=1 // pred_region
      _
    $region13: #{tpu_custom_call.1} parent=1 // pred_fallthru
      _
    // Predicated region
    $region14: #{tpu_custom_call.1} parent=1 // pred_check
      _
    $region15: #{tpu_custom_call.1} parent=1 // pred_check_branch
      %42 = sbr.rel (0) target = $region17
    $region16: #{tpu_custom_call.1} parent=1 // pred_region
      %s44 = ssub.s32 1024, 1024
      %45 = vsyncadd [#allocation6], %s44
      %s46 = sshll.u32 [#allocation7], 4
      %s47 = int_to_ptr.vmem [resolvable:$true] %s46
      %52 = dma.hbm_to_vmem [thread:$0]  %s3, 1024, %s47, [#allocation6], 128, 128, 8
    $region17: #{tpu_custom_call.1} parent=1 // pred_fallthru
      _
    // Predicated region
    $region18: #{tpu_custom_call.1} parent=1 // pred_check
      _
    $region19: #{tpu_custom_call.1} parent=1 // pred_check_branch
      %54 = sbr.rel (0) target = $region21
    $region20: #{tpu_custom_call.1} parent=1 // pred_region
      %s56 = ssub.s32 512, 512
      %57 = vsyncadd [#allocation9], %s56
      %s58 = sshll.u32 [#allocation8], 4
      %s59 = int_to_ptr.vmem [resolvable:$true] %s58
      %64 = dma.hbm_to_vmem [thread:$0]  %s4, 512, %s59, [#allocation9], 64, 64, 4
    $region21: #{tpu_custom_call.1} parent=1 // pred_fallthru
      _
    // Predicated region
    $region22: #{tpu_custom_call.1} parent=1 // pred_check
      _
    $region23: #{tpu_custom_call.1} parent=1 // pred_check_branch
      %66 = sbr.rel (0) target = $region25
    $region24: #{tpu_custom_call.1} parent=1 // pred_region
      _
    $region25: #{tpu_custom_call.1} parent=1 // pred_fallthru
      _
    // Predicated region
    $region26: #{tpu_custom_call.1} parent=1 // pred_check
      _
    $region27: #{tpu_custom_call.1} parent=1 // pred_check_branch
      %68 = sbr.rel (0) target = $region29
    $region28: #{tpu_custom_call.1} parent=1 // pred_region
      %69 = dma.done [#allocation3], 128
    $region29: #{tpu_custom_call.1} parent=1 // pred_fallthru
      _
    // Predicated region
    $region30: #{tpu_custom_call.1} parent=1 // pred_check
      _
    $region31: #{tpu_custom_call.1} parent=1 // pred_check_branch
      %71 = sbr.rel (0) target = $region33
    $region32: #{tpu_custom_call.1} parent=1 // pred_region
      %72 = dma.done [#allocation6], 512
    $region33: #{tpu_custom_call.1} parent=1 // pred_fallthru
      _
    // Predicated region
    $region34: #{tpu_custom_call.1} parent=1 // pred_check
      _
    $region35: #{tpu_custom_call.1} parent=1 // pred_check_branch
      %74 = sbr.rel (0) target = $region37
    $region36: #{tpu_custom_call.1} parent=1 // pred_region
      %75 = dma.done [#allocation6], 1024
    $region37: #{tpu_custom_call.1} parent=1 // pred_fallthru
      _
    // Predicated region
    $region38: #{tpu_custom_call.1} parent=1 // pred_check
      _
    $region39: #{tpu_custom_call.1} parent=1 // pred_check_branch
      %77 = sbr.rel (0) target = $region41
    $region40: #{tpu_custom_call.1} parent=1 // pred_region
      %78 = dma.done [#allocation9], 512
    $region41: #{tpu_custom_call.1} parent=1 // pred_fallthru
      _
    %v80 = vld [vmem:[#allocation2] sm:$0xf]
    %v81 = vld [vmem:[#allocation2 + $0x4] sm:$0xf]
    %v82 = vld [vmem:[#allocation5] sm:$0xff]
    %v83 = vld [vmem:[#allocation5 + $0x8] sm:$0xff]
    %v84 = vld [vmem:[#allocation5 + $0x10] sm:$0xff]
    %v85 = vld [vmem:[#allocation5 + $0x18] sm:$0xff]
    %v86 = vld [vmem:[%s2] sm:$0x3]
    %v88 = vlaneseq
    %v89 = vshrl.u32 %v88, 7
    %v90 = vsub.s32 0, %v89
    %v91 = vrot.slane %v86, %v90
    %v92 = vlaneseq
    %v93 = vshrl.u32 %v92, 7
    %v94 = vsub.s32 1, %v93
    %v95 = vrot.slane %v86, %v94
    %v100 = vunpack.c.l.b16 %v80
    %v101 = vunpack.c.l.b16 %v81
    %v102 = vpack.c.b16 %v101, %v100
    %v107 = vunpack.c.l.b16 %v82
    %v108 = vunpack.c.h.b16 %v82
    %v109 = vunpack.c.l.b16 %v83
    %v110 = vunpack.c.h.b16 %v83
    %v111 = vunpack.c.l.b16 %v84
    %v112 = vunpack.c.h.b16 %v84
    %v113 = vunpack.c.l.b16 %v85
    %v114 = vunpack.c.h.b16 %v85
    %v115 = vpack.c.b16 %v109, %v107
    %v116 = vpack.c.b16 %v110, %v108
    %v117 = vpack.c.b16 %v113, %v111
    %v118 = vpack.c.b16 %v114, %v112
    %vm123 = vcmask 261120
    %v125 = vsel %vm123, %v102, 0
    %127 = vmatprep.subr.bf16.mxu0 %v116
    %128 = vmatpush1.bf16.msra.mxu0 %v115
    %129 = vmatprep.subr.bf16.mxu0 %v118
    %130 = vmatpush1.bf16.msra.mxu0 %v117
    %131 = vmatprep.subr.bf16.mxu0 0
    %132 = vmatpush1.bf16.msra.mxu0 0
    %133 = vmatprep.subr.bf16.mxu0 0
    %134 = vmatpush1.bf16.msra.mxu0 0
    %135 = vmatprep.subr.bf16.mxu0 0
    %136 = vmatpush1.bf16.msra.mxu0 0
    %137 = vmatprep.subr.bf16.mxu0 0
    %138 = vmatpush1.bf16.msra.mxu0 0
    %139 = vmatprep.subr.bf16.mxu0 0
    %140 = vmatpush1.bf16.msra.mxu0 0
    %141 = vmatprep.subr.bf16.mxu0 0
    %142 = vmatpush1.bf16.msra.mxu0 0
    %143 = vmatprep.subr.bf16.mxu0 0
    %144 = vmatpush1.bf16.msra.mxu0 0
    %145 = vmatprep.subr.bf16.mxu0 0
    %146 = vmatpush1.bf16.msra.mxu0 0
    %147 = vmatprep.subr.bf16.mxu0 0
    %148 = vmatpush1.bf16.msra.mxu0 0
    %149 = vmatprep.subr.bf16.mxu0 0
    %150 = vmatpush1.bf16.msra.mxu0 0
    %151 = vmatprep.subr.bf16.mxu0 0
    %152 = vmatpush1.bf16.msra.mxu0 0
    %153 = vmatprep.subr.bf16.mxu0 0
    %154 = vmatpush1.bf16.msra.mxu0 0
    %155 = vmatprep.subr.bf16.mxu0 0
    %156 = vmatpush1.bf16.msra.mxu0 0
    %157 = vmatprep.subr.bf16.mxu0 0
    %158 = vmatpush1.bf16.msra.mxu0 0
    %159 = vmatprep.mubr.bf16.mxu0 0
    %160 = vmatmul.mubr.bf16.gmra.mrb[0].mxu0 %v125
    %v161 = vpop.f32.mrb[0].mxu0
    %v162 = vadd.f32 %v91, %v161
    %v163 = vpop.f32.mrb[0].mxu0
    %v164 = vadd.f32 %v95, %v163
    %v165 = vpop.f32.mrb[0].mxu0
    %v166 = vadd.f32 %v91, %v165
    %v167 = vpop.f32.mrb[0].mxu0
    %v168 = vadd.f32 %v95, %v167
    %169 = vdwg.mxu0
    %v170 = vld [vmem:[#allocation7] sm:$0xff]
    %v171 = vld [vmem:[#allocation7 + $0x8] sm:$0xff]
    %v172 = vld [vmem:[#allocation7 + $0x10] sm:$0xff]
    %v173 = vld [vmem:[#allocation7 + $0x18] sm:$0xff]
    %v174 = vld [vmem:[#allocation7 + $0x20] sm:$0xff]
    %v175 = vld [vmem:[#allocation7 + $0x28] sm:$0xff]
    %v176 = vld [vmem:[#allocation7 + $0x30] sm:$0xff]
    %v177 = vld [vmem:[#allocation7 + $0x38] sm:$0xff]
    %v186 = vunpack.c.l.b16 %v170
    %v187 = vunpack.c.h.b16 %v170
    %v188 = vunpack.c.l.b16 %v171
    %v189 = vunpack.c.h.b16 %v171
    %v190 = vunpack.c.l.b16 %v172
    %v191 = vunpack.c.h.b16 %v172
    %v192 = vunpack.c.l.b16 %v173
    %v193 = vunpack.c.h.b16 %v173
    %v194 = vunpack.c.l.b16 %v174
    %v195 = vunpack.c.h.b16 %v174
    %v196 = vunpack.c.l.b16 %v175
    %v197 = vunpack.c.h.b16 %v175
    %v198 = vunpack.c.l.b16 %v176
    %v199 = vunpack.c.h.b16 %v176
    %v200 = vunpack.c.l.b16 %v177
    %v201 = vunpack.c.h.b16 %v177
    %v202 = vpack.c.b16 %v188, %v186
    %v203 = vpack.c.b16 %v189, %v187
    %v204 = vpack.c.b16 %v192, %v190
    %v205 = vpack.c.b16 %v193, %v191
    %v206 = vpack.c.b16 %v196, %v194
    %v207 = vpack.c.b16 %v197, %v195
    %v208 = vpack.c.b16 %v200, %v198
    %v209 = vpack.c.b16 %v201, %v199
    %vm218 = vcmask 523264
    %v220 = vsel %vm218, 0, 0
    %222 = vmatprep.subr.bf16.mxu0 %v203
    %223 = vmatpush1.bf16.msra.mxu0 %v202
    %224 = vmatprep.subr.bf16.mxu0 %v205
    %225 = vmatpush1.bf16.msra.mxu0 %v204
    %226 = vmatprep.subr.bf16.mxu0 %v207
    %227 = vmatpush1.bf16.msra.mxu0 %v206
    %228 = vmatprep.subr.bf16.mxu0 %v209
    %229 = vmatpush1.bf16.msra.mxu0 %v208
    %230 = vmatprep.subr.bf16.mxu0 0
    %231 = vmatpush1.bf16.msra.mxu0 0
    %232 = vmatprep.subr.bf16.mxu0 0
    %233 = vmatpush1.bf16.msra.mxu0 0
    %234 = vmatprep.subr.bf16.mxu0 0
    %235 = vmatpush1.bf16.msra.mxu0 0
    %236 = vmatprep.subr.bf16.mxu0 0
    %237 = vmatpush1.bf16.msra.mxu0 0
    %238 = vmatprep.subr.bf16.mxu0 0
    %239 = vmatpush1.bf16.msra.mxu0 0
    %240 = vmatprep.subr.bf16.mxu0 0
    %241 = vmatpush1.bf16.msra.mxu0 0
    %242 = vmatprep.subr.bf16.mxu0 0
    %243 = vmatpush1.bf16.msra.mxu0 0
    %244 = vmatprep.subr.bf16.mxu0 0
    %245 = vmatpush1.bf16.msra.mxu0 0
    %246 = vmatprep.subr.bf16.mxu0 0
    %247 = vmatpush1.bf16.msra.mxu0 0
    %248 = vmatprep.subr.bf16.mxu0 0
    %249 = vmatpush1.bf16.msra.mxu0 0
    %250 = vmatprep.subr.bf16.mxu0 0
    %251 = vmatpush1.bf16.msra.mxu0 0
    %252 = vmatprep.subr.bf16.mxu0 0
    %253 = vmatpush1.bf16.msra.mxu0 0
    %254 = vmatprep.mubr.bf16.mxu0 0
    %255 = vmatmul.mubr.bf16.gmra.mrb[0].mxu0 %v220
    %v256 = vpop.f32.mrb[0].mxu0
    %v257 = vadd.f32 %v162, %v256
    %v258 = vpop.f32.mrb[0].mxu0
    %v259 = vadd.f32 %v164, %v258
    %v260 = vpop.f32.mrb[0].mxu0
    %v261 = vpop.f32.mrb[0].mxu0
    %262 = vdwg.mxu0
    %v263 = vxor.u32 %v257, 2147483648
    %v264 = vxor.u32 %v259, 2147483648
    %v265 = vmul.f32 %v263, 1.442695
    %v266 = vpow.pop %v265
    %v267 = vmul.f32 %v264, 1.442695
    %v268 = vpow.pop %v267
    %v269 = vadd.f32 %v266, 1.0
    %v270 = vadd.f32 %v268, 1.0
    %v271 = vrcp.pop %v269
    %v272 = vmul.f32 1.0, %v271
    %v273 = vrcp.pop %v270
    %v274 = vmul.f32 1.0, %v273
    %v275 = vtanh.pop %v259
    %v276 = vmul.f32 %v272, 0.0
    %278 = vrot.lane.b32.xlu0 %v275, 64
    %v279 = vpop.permute.xlu0 %278
    %v281 = vmul.f32 %v272, %v279
    %283 = vrot.lane.b32.xlu0 %v281, 64
    %v284 = vpop.permute.xlu0 %283
    %v286 = vadd.f32 %v276, %v284
    %v287 = vtanh.pop %v286
    %289 = vrot.lane.b32.xlu0 %v287, 64
    %v290 = vpop.permute.xlu0 %289
    %v292 = vmul.f32 %v274, %v290
    %v293 = vpack.c.bf16 %v292, %v292
    %v296 = vrot.slane %v162, 2
    %v297 = vrot.slane %v164, 2
    %v301 = vsel %vm218, %v293, 0
    %303 = vmatprep.subr.bf16.mxu0 %v203
    %304 = vmatpush1.bf16.msra.mxu0 %v202
    %305 = vmatprep.subr.bf16.mxu0 %v205
    %306 = vmatpush1.bf16.msra.mxu0 %v204
    %307 = vmatprep.subr.bf16.mxu0 %v207
    %308 = vmatpush1.bf16.msra.mxu0 %v206
    %309 = vmatprep.subr.bf16.mxu0 %v209
    %310 = vmatpush1.bf16.msra.mxu0 %v208
    %311 = vmatprep.subr.bf16.mxu0 0
    %312 = vmatpush1.bf16.msra.mxu0 0
    %313 = vmatprep.subr.bf16.mxu0 0
    %314 = vmatpush1.bf16.msra.mxu0 0
    %315 = vmatprep.subr.bf16.mxu0 0
    %316 = vmatpush1.bf16.msra.mxu0 0
    %317 = vmatprep.subr.bf16.mxu0 0
    %318 = vmatpush1.bf16.msra.mxu0 0
    %319 = vmatprep.subr.bf16.mxu0 0
    %320 = vmatpush1.bf16.msra.mxu0 0
    %321 = vmatprep.subr.bf16.mxu0 0
    %322 = vmatpush1.bf16.msra.mxu0 0
    %323 = vmatprep.subr.bf16.mxu0 0
    %324 = vmatpush1.bf16.msra.mxu0 0
    %325 = vmatprep.subr.bf16.mxu0 0
    %326 = vmatpush1.bf16.msra.mxu0 0
    %327 = vmatprep.subr.bf16.mxu0 0
    %328 = vmatpush1.bf16.msra.mxu0 0
    %329 = vmatprep.subr.bf16.mxu0 0
    %330 = vmatpush1.bf16.msra.mxu0 0
    %331 = vmatprep.subr.bf16.mxu0 0
    %332 = vmatpush1.bf16.msra.mxu0 0
    %333 = vmatprep.subr.bf16.mxu0 0
    %334 = vmatpush1.bf16.msra.mxu0 0
    %335 = vmatprep.mubr.bf16.mxu0 0
    %336 = vmatmul.mubr.bf16.gmra.mrb[0].mxu0 %v301
    %v337 = vpop.f32.mrb[0].mxu0
    %v338 = vadd.f32 %v296, %v337
    %v339 = vpop.f32.mrb[0].mxu0
    %v340 = vadd.f32 %v297, %v339
    %v341 = vpop.f32.mrb[0].mxu0
    %v342 = vpop.f32.mrb[0].mxu0
    %343 = vdwg.mxu0
    %v344 = vxor.u32 %v338, 2147483648
    %v345 = vxor.u32 %v340, 2147483648
    %v346 = vmul.f32 %v344, 1.442695
    %v347 = vpow.pop %v346
    %v348 = vmul.f32 %v345, 1.442695
    %v349 = vpow.pop %v348
    %v350 = vadd.f32 %v347, 1.0
    %v351 = vadd.f32 %v349, 1.0
    %v352 = vrcp.pop %v350
    %v353 = vmul.f32 1.0, %v352
    %v354 = vrcp.pop %v351
    %v355 = vmul.f32 1.0, %v354
    %v356 = vtanh.pop %v340
    %v357 = vmul.f32 %v353, %v286
    %359 = vrot.lane.b32.xlu0 %v356, 64
    %v360 = vpop.permute.xlu0 %359
    %v362 = vmul.f32 %v353, %v360
    %364 = vrot.lane.b32.xlu0 %v362, 64
    %v365 = vpop.permute.xlu0 %364
    %v367 = vadd.f32 %v357, %v365
    %v368 = vtanh.pop %v367
    %370 = vrot.lane.b32.xlu0 %v368, 64
    %v371 = vpop.permute.xlu0 %370
    %v373 = vmul.f32 %v355, %v371
    %v374 = vpack.c.bf16 %v373, %v373
    %v375 = vrot.slane %v162, 4
    %v376 = vrot.slane %v164, 4
    %v380 = vsel %vm218, %v374, 0
    %382 = vmatprep.subr.bf16.mxu0 %v203
    %383 = vmatpush1.bf16.msra.mxu0 %v202
    %384 = vmatprep.subr.bf16.mxu0 %v205
    %385 = vmatpush1.bf16.msra.mxu0 %v204
    %386 = vmatprep.subr.bf16.mxu0 %v207
    %387 = vmatpush1.bf16.msra.mxu0 %v206
    %388 = vmatprep.subr.bf16.mxu0 %v209
    %389 = vmatpush1.bf16.msra.mxu0 %v208
    %390 = vmatprep.subr.bf16.mxu0 0
    %391 = vmatpush1.bf16.msra.mxu0 0
    %392 = vmatprep.subr.bf16.mxu0 0
    %393 = vmatpush1.bf16.msra.mxu0 0
    %394 = vmatprep.subr.bf16.mxu0 0
    %395 = vmatpush1.bf16.msra.mxu0 0
    %396 = vmatprep.subr.bf16.mxu0 0
    %397 = vmatpush1.bf16.msra.mxu0 0
    %398 = vmatprep.subr.bf16.mxu0 0
    %399 = vmatpush1.bf16.msra.mxu0 0
    %400 = vmatprep.subr.bf16.mxu0 0
    %401 = vmatpush1.bf16.msra.mxu0 0
    %402 = vmatprep.subr.bf16.mxu0 0
    %403 = vmatpush1.bf16.msra.mxu0 0
    %404 = vmatprep.subr.bf16.mxu0 0
    %405 = vmatpush1.bf16.msra.mxu0 0
    %406 = vmatprep.subr.bf16.mxu0 0
    %407 = vmatpush1.bf16.msra.mxu0 0
    %408 = vmatprep.subr.bf16.mxu0 0
    %409 = vmatpush1.bf16.msra.mxu0 0
    %410 = vmatprep.subr.bf16.mxu0 0
    %411 = vmatpush1.bf16.msra.mxu0 0
    %412 = vmatprep.subr.bf16.mxu0 0
    %413 = vmatpush1.bf16.msra.mxu0 0
    %414 = vmatprep.mubr.bf16.mxu0 0
    %415 = vmatmul.mubr.bf16.gmra.mrb[0].mxu0 %v380
    %v416 = vpop.f32.mrb[0].mxu0
    %v417 = vadd.f32 %v375, %v416
    %v418 = vpop.f32.mrb[0].mxu0
    %v419 = vadd.f32 %v376, %v418
    %v420 = vpop.f32.mrb[0].mxu0
    %v421 = vpop.f32.mrb[0].mxu0
    %422 = vdwg.mxu0
    %v423 = vxor.u32 %v417, 2147483648
    %v424 = vxor.u32 %v419, 2147483648
    %v425 = vmul.f32 %v423, 1.442695
    %v426 = vpow.pop %v425
    %v427 = vmul.f32 %v424, 1.442695
    %v428 = vpow.pop %v427
    %v429 = vadd.f32 %v426, 1.0
    %v430 = vadd.f32 %v428, 1.0
    %v431 = vrcp.pop %v429
    %v432 = vmul.f32 1.0, %v431
    %v433 = vrcp.pop %v430
    %v434 = vmul.f32 1.0, %v433
    %v435 = vtanh.pop %v419
    %v436 = vmul.f32 %v432, %v367
    %438 = vrot.lane.b32.xlu0 %v435, 64
    %v439 = vpop.permute.xlu0 %438
    %v441 = vmul.f32 %v432, %v439
    %443 = vrot.lane.b32.xlu0 %v441, 64
    %v444 = vpop.permute.xlu0 %443
    %v446 = vadd.f32 %v436, %v444
    %v447 = vtanh.pop %v446
    %449 = vrot.lane.b32.xlu0 %v447, 64
    %v450 = vpop.permute.xlu0 %449
    %v452 = vmul.f32 %v434, %v450
    %v453 = vpack.c.bf16 %v452, %v452
    %v454 = vrot.slane %v162, 6
    %v455 = vrot.slane %v164, 6
    %v459 = vsel %vm218, %v453, 0
    %461 = vmatprep.subr.bf16.mxu0 %v203
    %462 = vmatpush1.bf16.msra.mxu0 %v202
    %463 = vmatprep.subr.bf16.mxu0 %v205
    %464 = vmatpush1.bf16.msra.mxu0 %v204
    %465 = vmatprep.subr.bf16.mxu0 %v207
    %466 = vmatpush1.bf16.msra.mxu0 %v206
    %467 = vmatprep.subr.bf16.mxu0 %v209
    %468 = vmatpush1.bf16.msra.mxu0 %v208
    %469 = vmatprep.subr.bf16.mxu0 0
    %470 = vmatpush1.bf16.msra.mxu0 0
    %471 = vmatprep.subr.bf16.mxu0 0
    %472 = vmatpush1.bf16.msra.mxu0 0
    %473 = vmatprep.subr.bf16.mxu0 0
    %474 = vmatpush1.bf16.msra.mxu0 0
    %475 = vmatprep.subr.bf16.mxu0 0
    %476 = vmatpush1.bf16.msra.mxu0 0
    %477 = vmatprep.subr.bf16.mxu0 0
    %478 = vmatpush1.bf16.msra.mxu0 0
    %479 = vmatprep.subr.bf16.mxu0 0
    %480 = vmatpush1.bf16.msra.mxu0 0
    %481 = vmatprep.subr.bf16.mxu0 0
    %482 = vmatpush1.bf16.msra.mxu0 0
    %483 = vmatprep.subr.bf16.mxu0 0
    %484 = vmatpush1.bf16.msra.mxu0 0
    %485 = vmatprep.subr.bf16.mxu0 0
    %486 = vmatpush1.bf16.msra.mxu0 0
    %487 = vmatprep.subr.bf16.mxu0 0
    %488 = vmatpush1.bf16.msra.mxu0 0
    %489 = vmatprep.subr.bf16.mxu0 0
    %490 = vmatpush1.bf16.msra.mxu0 0
    %491 = vmatprep.subr.bf16.mxu0 0
    %492 = vmatpush1.bf16.msra.mxu0 0
    %493 = vmatprep.mubr.bf16.mxu0 0
    %494 = vmatmul.mubr.bf16.gmra.mrb[0].mxu0 %v459
    %v495 = vpop.f32.mrb[0].mxu0
    %v496 = vadd.f32 %v454, %v495
    %v497 = vpop.f32.mrb[0].mxu0
    %v498 = vadd.f32 %v455, %v497
    %v499 = vpop.f32.mrb[0].mxu0
    %v500 = vpop.f32.mrb[0].mxu0
    %501 = vdwg.mxu0
    %v502 = vxor.u32 %v496, 2147483648
    %v503 = vxor.u32 %v498, 2147483648
    %v504 = vmul.f32 %v502, 1.442695
    %v505 = vpow.pop %v504
    %v506 = vmul.f32 %v503, 1.442695
    %v507 = vpow.pop %v506
    %v508 = vadd.f32 %v505, 1.0
    %v509 = vadd.f32 %v507, 1.0
    %v510 = vrcp.pop %v508
    %v511 = vmul.f32 1.0, %v510
    %v512 = vrcp.pop %v509
    %v513 = vmul.f32 1.0, %v512
    %v514 = vtanh.pop %v498
    %v515 = vmul.f32 %v511, %v446
    %517 = vrot.lane.b32.xlu0 %v514, 64
    %v518 = vpop.permute.xlu0 %517
    %v520 = vmul.f32 %v511, %v518
    %522 = vrot.lane.b32.xlu0 %v520, 64
    %v523 = vpop.permute.xlu0 %522
    %v525 = vadd.f32 %v515, %v523
    %v526 = vtanh.pop %v525
    %528 = vrot.lane.b32.xlu0 %v526, 64
    %v529 = vpop.permute.xlu0 %528
    %v531 = vmul.f32 %v513, %v529
    %v532 = vpack.c.bf16 %v531, %v531
    %v534 = vsel %vm218, %v532, 0
    %536 = vmatprep.subr.bf16.mxu0 %v203
    %537 = vmatpush1.bf16.msra.mxu0 %v202
    %538 = vmatprep.subr.bf16.mxu0 %v205
    %539 = vmatpush1.bf16.msra.mxu0 %v204
    %540 = vmatprep.subr.bf16.mxu0 %v207
    %541 = vmatpush1.bf16.msra.mxu0 %v206
    %542 = vmatprep.subr.bf16.mxu0 %v209
    %543 = vmatpush1.bf16.msra.mxu0 %v208
    %544 = vmatprep.subr.bf16.mxu0 0
    %545 = vmatpush1.bf16.msra.mxu0 0
    %546 = vmatprep.subr.bf16.mxu0 0
    %547 = vmatpush1.bf16.msra.mxu0 0
    %548 = vmatprep.subr.bf16.mxu0 0
    %549 = vmatpush1.bf16.msra.mxu0 0
    %550 = vmatprep.subr.bf16.mxu0 0
    %551 = vmatpush1.bf16.msra.mxu0 0
    %552 = vmatprep.subr.bf16.mxu0 0
    %553 = vmatpush1.bf16.msra.mxu0 0
    %554 = vmatprep.subr.bf16.mxu0 0
    %555 = vmatpush1.bf16.msra.mxu0 0
    %556 = vmatprep.subr.bf16.mxu0 0
    %557 = vmatpush1.bf16.msra.mxu0 0
    %558 = vmatprep.subr.bf16.mxu0 0
    %559 = vmatpush1.bf16.msra.mxu0 0
    %560 = vmatprep.subr.bf16.mxu0 0
    %561 = vmatpush1.bf16.msra.mxu0 0
    %562 = vmatprep.subr.bf16.mxu0 0
    %563 = vmatpush1.bf16.msra.mxu0 0
    %564 = vmatprep.subr.bf16.mxu0 0
    %565 = vmatpush1.bf16.msra.mxu0 0
    %566 = vmatprep.subr.bf16.mxu0 0
    %567 = vmatpush1.bf16.msra.mxu0 0
    %568 = vmatprep.mubr.bf16.mxu0 0
    %569 = vmatmul.mubr.bf16.gmra.mrb[0].mxu0 %v534
    %v570 = vpop.f32.mrb[0].mxu0
    %v571 = vadd.f32 %v166, %v570
    %v572 = vpop.f32.mrb[0].mxu0
    %v573 = vadd.f32 %v168, %v572
    %v574 = vpop.f32.mrb[0].mxu0
    %v575 = vpop.f32.mrb[0].mxu0
    %576 = vdwg.mxu0
    %v577 = vxor.u32 %v571, 2147483648
    %v578 = vxor.u32 %v573, 2147483648
    %v579 = vmul.f32 %v577, 1.442695
    %v580 = vpow.pop %v579
    %v581 = vmul.f32 %v578, 1.442695
    %v582 = vpow.pop %v581
    %v583 = vadd.f32 %v580, 1.0
    %v584 = vadd.f32 %v582, 1.0
    %v585 = vrcp.pop %v583
    %v586 = vmul.f32 1.0, %v585
    %v587 = vrcp.pop %v584
    %v588 = vmul.f32 1.0, %v587
    %v589 = vtanh.pop %v573
    %v590 = vmul.f32 %v586, %v525
    %592 = vrot.lane.b32.xlu0 %v589, 64
    %v593 = vpop.permute.xlu0 %592
    %v595 = vmul.f32 %v586, %v593
    %597 = vrot.lane.b32.xlu0 %v595, 64
    %v598 = vpop.permute.xlu0 %597
    %v600 = vadd.f32 %v590, %v598
    %v601 = vtanh.pop %v600
    %603 = vrot.lane.b32.xlu0 %v601, 64
    %v604 = vpop.permute.xlu0 %603
    %v606 = vmul.f32 %v588, %v604
    %v607 = vpack.c.bf16 %v606, %v606
    %v610 = vrot.slane %v166, 2
    %v611 = vrot.slane %v168, 2
    %v615 = vsel %vm218, %v607, 0
    %617 = vmatprep.subr.bf16.mxu0 %v203
    %618 = vmatpush1.bf16.msra.mxu0 %v202
    %619 = vmatprep.subr.bf16.mxu0 %v205
    %620 = vmatpush1.bf16.msra.mxu0 %v204
    %621 = vmatprep.subr.bf16.mxu0 %v207
    %622 = vmatpush1.bf16.msra.mxu0 %v206
    %623 = vmatprep.subr.bf16.mxu0 %v209
    %624 = vmatpush1.bf16.msra.mxu0 %v208
    %625 = vmatprep.subr.bf16.mxu0 0
    %626 = vmatpush1.bf16.msra.mxu0 0
    %627 = vmatprep.subr.bf16.mxu0 0
    %628 = vmatpush1.bf16.msra.mxu0 0
    %629 = vmatprep.subr.bf16.mxu0 0
    %630 = vmatpush1.bf16.msra.mxu0 0
    %631 = vmatprep.subr.bf16.mxu0 0
    %632 = vmatpush1.bf16.msra.mxu0 0
    %633 = vmatprep.subr.bf16.mxu0 0
    %634 = vmatpush1.bf16.msra.mxu0 0
    %635 = vmatprep.subr.bf16.mxu0 0
    %636 = vmatpush1.bf16.msra.mxu0 0
    %637 = vmatprep.subr.bf16.mxu0 0
    %638 = vmatpush1.bf16.msra.mxu0 0
    %639 = vmatprep.subr.bf16.mxu0 0
    %640 = vmatpush1.bf16.msra.mxu0 0
    %641 = vmatprep.subr.bf16.mxu0 0
    %642 = vmatpush1.bf16.msra.mxu0 0
    %643 = vmatprep.subr.bf16.mxu0 0
    %644 = vmatpush1.bf16.msra.mxu0 0
    %645 = vmatprep.subr.bf16.mxu0 0
    %646 = vmatpush1.bf16.msra.mxu0 0
    %647 = vmatprep.subr.bf16.mxu0 0
    %648 = vmatpush1.bf16.msra.mxu0 0
    %649 = vmatprep.mubr.bf16.mxu0 0
    %650 = vmatmul.mubr.bf16.gmra.mrb[0].mxu0 %v615
    %v651 = vpop.f32.mrb[0].mxu0
    %v652 = vadd.f32 %v610, %v651
    %v653 = vpop.f32.mrb[0].mxu0
    %v654 = vadd.f32 %v611, %v653
    %v655 = vpop.f32.mrb[0].mxu0
    %v656 = vpop.f32.mrb[0].mxu0
    %657 = vdwg.mxu0
    %v658 = vxor.u32 %v652, 2147483648
    %v659 = vxor.u32 %v654, 2147483648
    %v660 = vmul.f32 %v658, 1.442695
    %v661 = vpow.pop %v660
    %v662 = vmul.f32 %v659, 1.442695
    %v663 = vpow.pop %v662
    %v664 = vadd.f32 %v661, 1.0
    %v665 = vadd.f32 %v663, 1.0
    %v666 = vrcp.pop %v664
    %v667 = vmul.f32 1.0, %v666
    %v668 = vrcp.pop %v665
    %v669 = vmul.f32 1.0, %v668
    %v670 = vtanh.pop %v654
    %v671 = vmul.f32 %v667, %v600
    %673 = vrot.lane.b32.xlu0 %v670, 64
    %v674 = vpop.permute.xlu0 %673
    %v676 = vmul.f32 %v667, %v674
    %678 = vrot.lane.b32.xlu0 %v676, 64
    %v679 = vpop.permute.xlu0 %678
    %v681 = vadd.f32 %v671, %v679
    %v682 = vtanh.pop %v681
    %684 = vrot.lane.b32.xlu0 %v682, 64
    %v685 = vpop.permute.xlu0 %684
    %v687 = vmul.f32 %v669, %v685
    %v688 = vpack.c.bf16 %v687, %v687
    %v689 = vrot.slane %v166, 4
    %v690 = vrot.slane %v168, 4
    %v694 = vsel %vm218, %v688, 0
    %696 = vmatprep.subr.bf16.mxu0 %v203
    %697 = vmatpush1.bf16.msra.mxu0 %v202
    %698 = vmatprep.subr.bf16.mxu0 %v205
    %699 = vmatpush1.bf16.msra.mxu0 %v204
    %700 = vmatprep.subr.bf16.mxu0 %v207
    %701 = vmatpush1.bf16.msra.mxu0 %v206
    %702 = vmatprep.subr.bf16.mxu0 %v209
    %703 = vmatpush1.bf16.msra.mxu0 %v208
    %704 = vmatprep.subr.bf16.mxu0 0
    %705 = vmatpush1.bf16.msra.mxu0 0
    %706 = vmatprep.subr.bf16.mxu0 0
    %707 = vmatpush1.bf16.msra.mxu0 0
    %708 = vmatprep.subr.bf16.mxu0 0
    %709 = vmatpush1.bf16.msra.mxu0 0
    %710 = vmatprep.subr.bf16.mxu0 0
    %711 = vmatpush1.bf16.msra.mxu0 0
    %712 = vmatprep.subr.bf16.mxu0 0
    %713 = vmatpush1.bf16.msra.mxu0 0
    %714 = vmatprep.subr.bf16.mxu0 0
    %715 = vmatpush1.bf16.msra.mxu0 0
    %716 = vmatprep.subr.bf16.mxu0 0
    %717 = vmatpush1.bf16.msra.mxu0 0
    %718 = vmatprep.subr.bf16.mxu0 0
    %719 = vmatpush1.bf16.msra.mxu0 0
    %720 = vmatprep.subr.bf16.mxu0 0
    %721 = vmatpush1.bf16.msra.mxu0 0
    %722 = vmatprep.subr.bf16.mxu0 0
    %723 = vmatpush1.bf16.msra.mxu0 0
    %724 = vmatprep.subr.bf16.mxu0 0
    %725 = vmatpush1.bf16.msra.mxu0 0
    %726 = vmatprep.subr.bf16.mxu0 0
    %727 = vmatpush1.bf16.msra.mxu0 0
    %728 = vmatprep.mubr.bf16.mxu0 0
    %729 = vmatmul.mubr.bf16.gmra.mrb[0].mxu0 %v694
    %v730 = vpop.f32.mrb[0].mxu0
    %v731 = vadd.f32 %v689, %v730
    %v732 = vpop.f32.mrb[0].mxu0
    %v733 = vadd.f32 %v690, %v732
    %v734 = vpop.f32.mrb[0].mxu0
    %v735 = vpop.f32.mrb[0].mxu0
    %736 = vdwg.mxu0
    %v737 = vxor.u32 %v731, 2147483648
    %v738 = vxor.u32 %v733, 2147483648
    %v739 = vmul.f32 %v737, 1.442695
    %v740 = vpow.pop %v739
    %v741 = vmul.f32 %v738, 1.442695
    %v742 = vpow.pop %v741
    %v743 = vadd.f32 %v740, 1.0
    %v744 = vadd.f32 %v742, 1.0
    %v745 = vrcp.pop %v743
    %v746 = vmul.f32 1.0, %v745
    %v747 = vrcp.pop %v744
    %v748 = vmul.f32 1.0, %v747
    %v749 = vtanh.pop %v733
    %v750 = vmul.f32 %v746, %v681
    %752 = vrot.lane.b32.xlu0 %v749, 64
    %v753 = vpop.permute.xlu0 %752
    %v755 = vmul.f32 %v746, %v753
    %757 = vrot.lane.b32.xlu0 %v755, 64
    %v758 = vpop.permute.xlu0 %757
    %v760 = vadd.f32 %v750, %v758
    %v761 = vtanh.pop %v760
    %763 = vrot.lane.b32.xlu0 %v761, 64
    %v764 = vpop.permute.xlu0 %763
    %v766 = vmul.f32 %v748, %v764
    %v767 = vpack.c.bf16 %v766, %v766
    %v768 = vrot.slane %v166, 6
    %v769 = vrot.slane %v168, 6
    %v773 = vsel %vm218, %v767, 0
    %775 = vmatprep.subr.bf16.mxu0 %v203
    %776 = vmatpush1.bf16.msra.mxu0 %v202
    %777 = vmatprep.subr.bf16.mxu0 %v205
    %778 = vmatpush1.bf16.msra.mxu0 %v204
    %779 = vmatprep.subr.bf16.mxu0 %v207
    %780 = vmatpush1.bf16.msra.mxu0 %v206
    %781 = vmatprep.subr.bf16.mxu0 %v209
    %782 = vmatpush1.bf16.msra.mxu0 %v208
    %783 = vmatprep.subr.bf16.mxu0 0
    %784 = vmatpush1.bf16.msra.mxu0 0
    %785 = vmatprep.subr.bf16.mxu0 0
    %786 = vmatpush1.bf16.msra.mxu0 0
    %787 = vmatprep.subr.bf16.mxu0 0
    %788 = vmatpush1.bf16.msra.mxu0 0
    %789 = vmatprep.subr.bf16.mxu0 0
    %790 = vmatpush1.bf16.msra.mxu0 0
    %791 = vmatprep.subr.bf16.mxu0 0
    %792 = vmatpush1.bf16.msra.mxu0 0
    %793 = vmatprep.subr.bf16.mxu0 0
    %794 = vmatpush1.bf16.msra.mxu0 0
    %795 = vmatprep.subr.bf16.mxu0 0
    %796 = vmatpush1.bf16.msra.mxu0 0
    %797 = vmatprep.subr.bf16.mxu0 0
    %798 = vmatpush1.bf16.msra.mxu0 0
    %799 = vmatprep.subr.bf16.mxu0 0
    %800 = vmatpush1.bf16.msra.mxu0 0
    %801 = vmatprep.subr.bf16.mxu0 0
    %802 = vmatpush1.bf16.msra.mxu0 0
    %803 = vmatprep.subr.bf16.mxu0 0
    %804 = vmatpush1.bf16.msra.mxu0 0
    %805 = vmatprep.subr.bf16.mxu0 0
    %806 = vmatpush1.bf16.msra.mxu0 0
    %807 = vmatprep.mubr.bf16.mxu0 0
    %808 = vmatmul.mubr.bf16.gmra.mrb[0].mxu0 %v773
    %v809 = vpop.f32.mrb[0].mxu0
    %v810 = vadd.f32 %v768, %v809
    %v811 = vpop.f32.mrb[0].mxu0
    %v812 = vadd.f32 %v769, %v811
    %v813 = vpop.f32.mrb[0].mxu0
    %v814 = vpop.f32.mrb[0].mxu0
    %815 = vdwg.mxu0
    %v816 = vxor.u32 %v810, 2147483648
    %v817 = vxor.u32 %v812, 2147483648
    %v818 = vmul.f32 %v816, 1.442695
    %v819 = vpow.pop %v818
    %v820 = vmul.f32 %v817, 1.442695
    %v821 = vpow.pop %v820
    %v822 = vadd.f32 %v819, 1.0
    %v823 = vadd.f32 %v821, 1.0
    %v824 = vrcp.pop %v822
    %v825 = vmul.f32 1.0, %v824
    %v826 = vrcp.pop %v823
    %v827 = vmul.f32 1.0, %v826
    %v828 = vtanh.pop %v812
    %v829 = vmul.f32 %v825, %v760
    %831 = vrot.lane.b32.xlu0 %v828, 64
    %v832 = vpop.permute.xlu0 %831
    %v834 = vmul.f32 %v825, %v832
    %836 = vrot.lane.b32.xlu0 %v834, 64
    %v837 = vpop.permute.xlu0 %836
    %v839 = vadd.f32 %v829, %v837
    %v840 = vtanh.pop %v839
    %842 = vrot.lane.b32.xlu0 %v840, 64
    %v843 = vpop.permute.xlu0 %842
    %v845 = vmul.f32 %v827, %v843
    %v847 = vrot.slane %v373, 6
    %v850 = vrot.slane %v452, 4
    %v853 = vrot.slane %v531, 2
    %v856 = vrot.slane %v687, 6
    %v859 = vrot.slane %v766, 4
    %v862 = vrot.slane %v845, 2
    %vm864 = vcmask 1041408
    %v865 = vsel %vm864, %v292, %v847
    %vm866 = vcmask 1043456
    %v867 = vsel %vm866, %v865, %v850
    %vm868 = vcmask 1045504
    %v869 = vsel %vm868, %v867, %v853
    %v870 = vsel %vm864, %v606, %v856
    %v871 = vsel %vm866, %v870, %v859
    %v872 = vsel %vm868, %v871, %v862
    %v873 = vrot.slane %v766, 6
    %v875 = vrot.slane %v687, 4
    %v878 = vrot.slane %v606, 2
    %v880 = vrot.slane %v452, 6
    %v882 = vrot.slane %v373, 4
    %v885 = vrot.slane %v292, 2
    %v887 = vsel %vm864, %v845, %v873
    %v888 = vsel %vm866, %v887, %v875
    %v889 = vsel %vm868, %v888, %v878
    %v890 = vsel %vm864, %v531, %v880
    %v891 = vsel %vm866, %v890, %v882
    %v892 = vsel %vm868, %v891, %v885
    %v893 = vsel %vm123, %v869, %v889
    %v894 = vsel %vm123, %v872, %v892
    %v895 = vpack.c.bf16 %v894, %v893
    %v896 = vld [vmem:[#allocation8] sm:$0xf]
    %v897 = vld [vmem:[#allocation8 + $0x4] sm:$0xf]
    %v898 = vld [vmem:[#allocation8 + $0x8] sm:$0xf]
    %v899 = vld [vmem:[#allocation8 + $0xc] sm:$0xf]
    %v900 = vld [vmem:[#allocation8 + $0x10] sm:$0xf]
    %v901 = vld [vmem:[#allocation8 + $0x14] sm:$0xf]
    %v902 = vld [vmem:[#allocation8 + $0x18] sm:$0xf]
    %v903 = vld [vmem:[#allocation8 + $0x1c] sm:$0xf]
    %v904 = vld [vmem:[%s5] sm:$0x1]
    %v906 = vlaneseq
    %v907 = vshrl.u32 %v906, 7
    %v908 = vsub.s32 0, %v907
    %v909 = vrot.slane %v904, %v908
    %v919 = vunpack.c.l.b16 %v896
    %v920 = vunpack.c.l.b16 %v897
    %v921 = vunpack.c.l.b16 %v898
    %v922 = vunpack.c.l.b16 %v899
    %v923 = vunpack.c.l.b16 %v900
    %v924 = vunpack.c.l.b16 %v901
    %v925 = vunpack.c.l.b16 %v902
    %v926 = vunpack.c.l.b16 %v903
    %v927 = vpack.c.b16 %v920, %v919
    %v928 = vpack.c.b16 %v922, %v921
    %v929 = vpack.c.b16 %v924, %v923
    %v930 = vpack.c.b16 %v926, %v925
    %v936 = vsel %vm218, %v895, 0
    %938 = vmatprep.subr.bf16.mxu0 0
    %939 = vmatpush1.bf16.msra.mxu0 %v927
    %940 = vmatprep.subr.bf16.mxu0 0
    %941 = vmatpush1.bf16.msra.mxu0 %v928
    %942 = vmatprep.subr.bf16.mxu0 0
    %943 = vmatpush1.bf16.msra.mxu0 %v929
    %944 = vmatprep.subr.bf16.mxu0 0
    %945 = vmatpush1.bf16.msra.mxu0 %v930
    %946 = vmatprep.subr.bf16.mxu0 0
    %947 = vmatpush1.bf16.msra.mxu0 0
    %948 = vmatprep.subr.bf16.mxu0 0
    %949 = vmatpush1.bf16.msra.mxu0 0
    %950 = vmatprep.subr.bf16.mxu0 0
    %951 = vmatpush1.bf16.msra.mxu0 0
    %952 = vmatprep.subr.bf16.mxu0 0
    %953 = vmatpush1.bf16.msra.mxu0 0
    %954 = vmatprep.subr.bf16.mxu0 0
    %955 = vmatpush1.bf16.msra.mxu0 0
    %956 = vmatprep.subr.bf16.mxu0 0
    %957 = vmatpush1.bf16.msra.mxu0 0
    %958 = vmatprep.subr.bf16.mxu0 0
    %959 = vmatpush1.bf16.msra.mxu0 0
    %960 = vmatprep.subr.bf16.mxu0 0
    %961 = vmatpush1.bf16.msra.mxu0 0
    %962 = vmatprep.subr.bf16.mxu0 0
    %963 = vmatpush1.bf16.msra.mxu0 0
    %964 = vmatprep.subr.bf16.mxu0 0
    %965 = vmatpush1.bf16.msra.mxu0 0
    %966 = vmatprep.subr.bf16.mxu0 0
    %967 = vmatpush1.bf16.msra.mxu0 0
    %968 = vmatprep.subr.bf16.mxu0 0
    %969 = vmatpush1.bf16.msra.mxu0 0
    %970 = vmatprep.mubr.bf16.mxu0 0
    %971 = vmatmul.mubr.bf16.gmra.mrb[0].mxu0 %v936
    %v972 = vpop.f32.mrb[0].mxu0
    %v973 = vadd.f32 %v909, %v972
    %v974 = vpop.f32.mrb[0].mxu0
    %v975 = vpop.f32.mrb[0].mxu0
    %v976 = vadd.f32 %v909, %v975
    %v977 = vpop.f32.mrb[0].mxu0
    %978 = vdwg.mxu0
    %979 = vst [vmem:[#allocation10] sm:$0xff] %v973
    %980 = vst [vmem:[#allocation10 + $0x8] sm:$0xff] %v976
    // Predicated region
    $region42: #{tpu_custom_call.1} parent=1 // pred_check
      _
    $region43: #{tpu_custom_call.1} parent=1 // pred_check_branch
      %982 = sbr.rel (0) target = $region45
    $region44: #{tpu_custom_call.1} parent=1 // pred_region
      %s984 = ssub.s32 256, 256
      %985 = vsyncadd [#allocation4], %s984
      %s986 = sshll.u32 [#allocation10], 4
      %s987 = int_to_ptr.vmem [resolvable:$true] %s986
      %992 = dma.vmem_to_hbm [thread:$0]  %s987, 256, %s6, [#allocation4], 128, 128, 8
    $region45: #{tpu_custom_call.1} parent=1 // pred_fallthru
      _
    // Predicated region
    $region46: #{tpu_custom_call.1} parent=1 // pred_check
      _
    $region47: #{tpu_custom_call.1} parent=1 // pred_check_branch
      %994 = sbr.rel (0) target = $region49
    $region48: #{tpu_custom_call.1} parent=1 // pred_region
      %995 = dma.done [#allocation4], 256
    $region49: #{tpu_custom_call.1} parent=1 // pred_fallthru
      _
    %996 = vsyncpa [#allocation3], 1
    %997 = vsyncpa [#allocation6], 1
    %998 = vsyncpa [#allocation9], 1
    %999 = vsyncpa [#allocation4], 1

</llo_original>
